<compile_context>
chip_gen: v7x
topology: tpu7x:2x2x1
jax: 0.10.0
libtpu: 0.0.40
codegen_flags: <defaults>
</compile_context>

<pallas_src>
import functools
import numpy as np
import jax
import jax.numpy as jnp
from jax.experimental import pallas as pl
from jax.experimental.pallas import tpu as pltpu


def _round_up(x, m):
    return ((x + m - 1) // m) * m


def _cdiv(a, b):
    return -(-a // b)


def _gaussian_approx_kernel(x_ref, w_ref, o_ref, z_scr, *, degree, tile_f, d_in,
                            inv_ls_out, inv_sqrt_deg, sqrt_bias, log_scale_const,
                            compute_dtype, product_dtype):
    # x_ref: (tile_n, d_in)  raw inputs
    # w_ref: (d_in+1, degree*tile_f) fused sketch weights (bias row included)
    # z_scr: (tile_n, d_in+1) persistent VMEM scratch holding the scaled, augmented z

    # Preamble hoisted: runs once per batch tile (feature axis j is innermost /
    # "arbitrary"); all nf feature blocks reuse z_scr.
    @pl.when(pl.program_id(1) == 0)
    def _():
        xs = x_ref[...].astype(jnp.float32) * inv_ls_out        # x / exp(log_lengthscale)
        norm_sq = jnp.sum(xs * xs, axis=-1, keepdims=True)      # (tn, 1)
        # (prefactor * exp(log_var/2) / sqrt(F)) ** (1/degree): commutes with the
        # matmul and exponentiates back through the degree-fold product.
        row_fac = jnp.exp((log_scale_const - 0.5 * norm_sq) * (1.0 / degree))
        zb = (sqrt_bias * row_fac).astype(compute_dtype)        # (tn, 1) bias column
        # Fill every lane with the bias value, then overwrite lanes [0, d_in) with
        # the scaled x part (offset-0 masked store; lane d_in keeps the bias value).
        z_scr[...] = jnp.broadcast_to(zb, z_scr.shape)
        z_scr[:, :d_in] = (xs * (inv_sqrt_deg * row_fac)).astype(compute_dtype)

    # One wide MXU matmul covering all `degree` sketches of this feature block.
    # The bias column rides along in z (K is MXU-padded anyway), so there is no
    # separate broadcast add and no extra DMA stream.
    y = jnp.dot(z_scr[...], w_ref[...], preferred_element_type=product_dtype)

    acc = y[:, 0:tile_f]
    for p in range(1, degree):                                  # static, 128-aligned lane slices
        acc = acc * y[:, p * tile_f:(p + 1) * tile_f]
    o_ref[...] = acc.astype(o_ref.dtype)


def prepare_fused_weights(w, *, tile_f, compute_dtype=jnp.bfloat16):
    """Reorder (degree, d_in+1, d_features) sketch weights into the fused
    (d_in+1, nf*degree*tile_f) layout ONCE, outside the per-call path.
    SRHT signs are +-1, so the bf16 cast is exact."""
    deg, d_aug, d_features = w.shape
    assert d_features % tile_f == 0 and tile_f % 128 == 0, \
        "d_features must be blockable into lane-dense multiples of 128"
    nf = d_features // tile_f
    w_r = w.reshape(deg, d_aug, nf, tile_f)
    w_fused = jnp.transpose(w_r, (1, 2, 0, 3)).reshape(d_aug, nf * deg * tile_f)
    return jnp.asarray(w_fused, compute_dtype)


def gaussian_approximator_forward(x, w_fused, *, degree, tile_f,
                                  log_lengthscale, log_var, bias=1.0,
                                  tile_n=1024,
                                  compute_dtype=jnp.bfloat16,
                                  product_dtype=None,
                                  out_dtype=jnp.bfloat16):
    """x: (N, d_in); w_fused: (d_in+1, nf*degree*tile_f) from prepare_fused_weights."""
    n, d_in = x.shape
    d_aug = w_fused.shape[0]
    assert d_aug == d_in + 1
    total_cols = w_fused.shape[1]
    d_features = total_cols // degree
    assert tile_f % 128 == 0 and d_features % tile_f == 0
    nf = d_features // tile_f
    assert nf * degree * tile_f == total_cols

    if product_dtype is None:
        # bf16 product halves the VMEM round-trip of the (tile_n, degree*tile_f)
        # intermediate (v6e/v7x bf16 VALUs). On v5e pass product_dtype=jnp.float32.
        product_dtype = compute_dtype

    # --- batch tiling: no padding, no trailing out[:n] slice copy ------------
    tile_n = max(8, _round_up(min(int(tile_n), _round_up(n, 8)), 8))
    if n >= 64 and _cdiv(n, tile_n) < 2:
        # v7x: keep >=2 batch tiles so the "parallel" axis shards across both TCs.
        tile_n = _round_up(_cdiv(n, 2), 8)

    # --- accurate VMEM estimate (keep working set v7x-safe) ------------------
    x_it = x.dtype.itemsize
    c_it = jnp.dtype(compute_dtype).itemsize
    p_it = jnp.dtype(product_dtype).itemsize
    o_it = jnp.dtype(out_dtype).itemsize

    def vmem_est(tn):
        return (2 * tn * d_in * x_it                   # x block (double-buffered)
                + 2 * d_aug * degree * tile_f * c_it   # weight block (double-buffered)
                + 2 * tn * tile_f * o_it               # out block (double-buffered)
                + tn * d_aug * c_it                    # z scratch
                + tn * degree * tile_f * p_it          # matmul intermediate y
                + tn * tile_f * p_it)                  # acc

    while vmem_est(tile_n) > 48 * 1024 * 1024 and tile_n > 256:
        tile_n = max(256, tile_n // 2)                 # v7x has only 64 MiB VMEM/TC
    vmem_limit = int(max(32 * 1024 * 1024, vmem_est(tile_n) + 16 * 1024 * 1024))

    grid_n = _cdiv(n, tile_n)

    # --- compile-time scalars -------------------------------------------------
    kernel = functools.partial(
        _gaussian_approx_kernel, degree=degree, tile_f=tile_f, d_in=d_in,
        inv_ls_out=float(1.0 / np.exp(log_lengthscale)),
        inv_sqrt_deg=float(1.0 / np.sqrt(degree)),
        sqrt_bias=float(np.sqrt(bias)),
        log_scale_const=float(0.5 * log_var - 0.5 * np.log(d_features)),
        compute_dtype=compute_dtype, product_dtype=product_dtype)

    out = pl.pallas_call(
        kernel,
        out_shape=jax.ShapeDtypeStruct((n, d_features), out_dtype),
        grid_spec=pltpu.PrefetchScalarGridSpec(
            num_scalar_prefetch=0,
            grid=(grid_n, nf),
            in_specs=[
                pl.BlockSpec((tile_n, d_in), lambda i, j: (i, 0)),
                pl.BlockSpec((d_aug, degree * tile_f), lambda i, j: (0, j)),
            ],
            out_specs=pl.BlockSpec((tile_n, tile_f), lambda i, j: (i, j)),
            scratch_shapes=[pltpu.VMEM((tile_n, d_aug), compute_dtype)],
        ),
        compiler_params=pltpu.CompilerParams(
            # Batch axis "parallel" (2-TC sharding on v7x); feature axis innermost
            # and "arbitrary" so the hoisted z preamble runs once per batch tile.
            dimension_semantics=("parallel", "arbitrary"),
            vmem_limit_bytes=vmem_limit),
    )(x, w_fused)
    return out


def make_srht_weights(key, d_aug, d_features, degree):
    """Deterministic SRHT-style projections, materialized as dense (D, F) sign matrices.
    Column j of W_p is  D_p @ H[idx_p[j], :]  with D_p random +-1 diag, H the +-1 Hadamard."""
    H = np.array([[1.0]], dtype=np.float32)
    while H.shape[0] < d_aug:
        H = np.block([[H, H], [H, -H]]).astype(np.float32)   # Sylvester Hadamard
    H = jnp.asarray(H)
    keys = jax.random.split(key, 2 * degree)
    ws = []
    for p in range(degree):
        signs = 2.0 * jax.random.bernoulli(keys[2 * p], 0.5, (d_aug,)).astype(jnp.float32) - 1.0
        idx = jax.random.randint(keys[2 * p + 1], (d_features,), 0, d_aug)
        w_p = signs[:, None] * H.T[:, idx]                    # (d_aug, d_features)
        ws.append(w_p)
    return jnp.stack(ws, axis=0)                              # (degree, d_aug, d_features)


def reference_forward(x, w, log_lengthscale, log_var, degree, bias=1.0):
    """Pure-JAX f32 reference of the same forward pass."""
    outer = np.exp(log_lengthscale)
    inner = np.sqrt(degree)
    xs = x / outer
    norm = jnp.linalg.norm(xs, axis=1, keepdims=True)
    pref = jnp.exp(-(norm ** 2) / 2.0)
    z = jnp.concatenate(
        [xs / inner, jnp.full((x.shape[0], 1), np.sqrt(bias), x.dtype)], axis=1)
    acc = jnp.ones((x.shape[0], w.shape[-1]), jnp.float32)
    for p in range(degree):
        acc = acc * (z @ w[p])
    feat = acc / np.sqrt(w.shape[-1])
    return feat * pref * np.exp(0.5 * log_var)


if __name__ == "__main__":
    # Module-consistent small shapes: srht + poly_sketch requires d_in = 2**n - 1.
    # N=250 exercises the ragged last batch tile; tile_f=128 exercises F blocking (nf=2).
    N, d_in, d_features, degree = 250, 15, 256, 4
    key = jax.random.PRNGKey(0)
    kx, kw = jax.random.split(key)

    x = jax.random.normal(kx, (N, d_in), dtype=jnp.float32)

    # Deterministic parameters (trainable_kernel=False): lengthscale='auto', var=1.0
    log_lengthscale = float(np.log(np.sqrt(d_in)))
    log_var = float(np.log(1.0))

    w = make_srht_weights(kw, d_in + 1, d_features, degree)
    ref = reference_forward(x, w, log_lengthscale, log_var, degree)

    tile_f = 128

    # f32-MXU path: tight tolerance vs. reference.
    w_f32 = prepare_fused_weights(w, tile_f=tile_f, compute_dtype=jnp.float32)
    out_f32 = gaussian_approximator_forward(
        x, w_f32, degree=degree, tile_f=tile_f,
        log_lengthscale=log_lengthscale, log_var=log_var,
        compute_dtype=jnp.float32, product_dtype=jnp.float32, out_dtype=jnp.float32)
    out_f32 = jax.block_until_ready(out_f32)
    np.testing.assert_allclose(np.asarray(out_f32), np.asarray(ref), rtol=1e-3, atol=1e-3)

    # Default path: bf16 matmul (f32 MXU accumulation), bf16 degree product,
    # bf16 output writeback. Loose tolerance: degree=4 products compound bf16 rounding.
    w_bf16 = prepare_fused_weights(w, tile_f=tile_f)          # bf16, exact for +-1 signs
    out_bf16 = gaussian_approximator_forward(
        x, w_bf16, degree=degree, tile_f=tile_f,
        log_lengthscale=log_lengthscale, log_var=log_var)
    out_bf16 = jax.block_until_ready(out_bf16)
    np.testing.assert_allclose(np.asarray(out_bf16).astype(np.float32),
                               np.asarray(ref), rtol=6e-2, atol=6e-3)

    # TODO(synk): exact SRHT block-subsampling internals, hierarchical/complex sketch
    # variants, maclaurin methods, and resample()/initialize_sampling_distribution are
    # not part of this forward pass; SRHT is materialized as dense sign matrices with
    # equivalent kernel semantics.
    print("KERNEL_OK")
</pallas_src>

<mosaic_0001>
module attributes {stable_mosaic.version = 11 : i64} {
  func.func @_gaussian_approx_kernel(%arg0: i32, %arg1: i32, %arg2: memref<128x15xf32, #tpu.memory_space<vmem>>, %arg3: memref<16x512xf32, #tpu.memory_space<vmem>>, %arg4: memref<128x128xf32, #tpu.memory_space<vmem>>, %arg5: memref<128x16xf32, #tpu.memory_space<vmem>>) attributes {dimension_semantics = [#tpu.dimension_semantics<parallel>, #tpu.dimension_semantics<arbitrary>], iteration_bounds = array<i64: 2, 2>, scalar_prefetch = 0 : i64, scratch_operands = 1 : i64, tpu.core_type = #tpu.core_type<tc>, window_params = [{transform_indices = @transform_0, window_bounds = array<i64: 128, 15>}, {transform_indices = @transform_1, window_bounds = array<i64: 16, 512>}, {transform_indices = @transform_2, window_bounds = array<i64: 128, 128>}]} {
    %c0_i32 = arith.constant 0 : i32
    %0 = arith.cmpi eq, %arg1, %c0_i32 : i32
    %1 = arith.extui %0 : i1 to i32
    %c0_i32_0 = arith.constant 0 : i32
    %2 = arith.cmpi ne, %1, %c0_i32_0 : i32
    scf.if %2 {
      %c0_6 = arith.constant 0 : index
      %c0_7 = arith.constant 0 : index
      %14 = vector.load %arg2[%c0_6, %c0_7] : memref<128x15xf32, #tpu.memory_space<vmem>>, vector<128x15xf32>
      %cst_8 = arith.constant 0.258198887 : f32
      %15 = vector.broadcast %cst_8 : f32 to vector<128x15xf32>
      %16 = arith.mulf %14, %15 : vector<128x15xf32>
      %17 = arith.mulf %16, %16 : vector<128x15xf32>
      %cst_9 = arith.constant dense<0.000000e+00> : vector<128xf32>
      %18 = vector.multi_reduction <add>, %17, %cst_9 [1] : vector<128x15xf32> to vector<128xf32>
      %19 = vector.shape_cast %18 : vector<128xf32> to vector<128x1xf32>
      %cst_10 = arith.constant 5.000000e-01 : f32
      %20 = vector.broadcast %cst_10 : f32 to vector<128x1xf32>
      %21 = arith.mulf %20, %19 : vector<128x1xf32>
      %cst_11 = arith.constant -2.77258873 : f32
      %22 = vector.broadcast %cst_11 : f32 to vector<128x1xf32>
      %23 = arith.subf %22, %21 : vector<128x1xf32>
      %cst_12 = arith.constant 2.500000e-01 : f32
      %24 = vector.broadcast %cst_12 : f32 to vector<128x1xf32>
      %25 = arith.mulf %23, %24 : vector<128x1xf32>
      %26 = math.exp %25 : vector<128x1xf32>
      %cst_13 = arith.constant 1.000000e+00 : f32
      %27 = vector.broadcast %cst_13 : f32 to vector<128x1xf32>
      %28 = arith.mulf %27, %26 : vector<128x1xf32>
      %29 = vector.shape_cast %28 : vector<128x1xf32> to vector<128x1xf32>
      %30 = vector.broadcast %29 : vector<128x1xf32> to vector<128x16xf32>
      %c0_14 = arith.constant 0 : index
      %c0_15 = arith.constant 0 : index
      %31 = vector.load %arg5[%c0_14, %c0_15] : memref<128x16xf32, #tpu.memory_space<vmem>>, vector<128x16xf32>
      tpu.vector_store %arg5[%c0_14, %c0_15], %30 {strides = array<i32>} : memref<128x16xf32, #tpu.memory_space<vmem>>, vector<128x16xf32>,
      %cst_16 = arith.constant 5.000000e-01 : f32
      %32 = vector.broadcast %cst_16 : f32 to vector<128x1xf32>
      %33 = arith.mulf %32, %26 : vector<128x1xf32>
      %34 = vector.broadcast %33 : vector<128x1xf32> to vector<128x15xf32>
      %35 = arith.mulf %16, %34 : vector<128x15xf32>
      %c0_17 = arith.constant 0 : index
      %c0_18 = arith.constant 0 : index
      %36 = vector.load %arg5[%c0_17, %c0_18] : memref<128x16xf32, #tpu.memory_space<vmem>>, vector<128x15xf32>
      tpu.vector_store %arg5[%c0_17, %c0_18], %35 {strides = array<i32>} : memref<128x16xf32, #tpu.memory_space<vmem>>, vector<128x15xf32>,
    } else {
    }
    %c0 = arith.constant 0 : index
    %c0_1 = arith.constant 0 : index
    %3 = vector.load %arg5[%c0, %c0_1] : memref<128x16xf32, #tpu.memory_space<vmem>>, vector<128x16xf32>
    %c0_2 = arith.constant 0 : index
    %c0_3 = arith.constant 0 : index
    %4 = vector.load %arg3[%c0_2, %c0_3] : memref<16x512xf32, #tpu.memory_space<vmem>>, vector<16x512xf32>
    %cst = arith.constant dense<0.000000e+00> : vector<128x512xf32>
    %5 = tpu.matmul %3, %4, %cst {dimension_numbers = #tpu.dot_dimension_numbers<[1], [0], [0], [1], [0, 0, 1, 1], [], []>} : vector<128x16xf32>, vector<16x512xf32>, vector<128x512xf32> -> vector<128x512xf32>
    %6 = vector.extract_strided_slice %5 {offsets = [0, 0], sizes = [128, 128], strides = [1, 1]} : vector<128x512xf32> to vector<128x128xf32>
    %7 = vector.extract_strided_slice %5 {offsets = [0, 128], sizes = [128, 128], strides = [1, 1]} : vector<128x512xf32> to vector<128x128xf32>
    %8 = arith.mulf %6, %7 : vector<128x128xf32>
    %9 = vector.extract_strided_slice %5 {offsets = [0, 256], sizes = [128, 128], strides = [1, 1]} : vector<128x512xf32> to vector<128x128xf32>
    %10 = arith.mulf %8, %9 : vector<128x128xf32>
    %11 = vector.extract_strided_slice %5 {offsets = [0, 384], sizes = [128, 128], strides = [1, 1]} : vector<128x512xf32> to vector<128x128xf32>
    %12 = arith.mulf %10, %11 : vector<128x128xf32>
    %c0_4 = arith.constant 0 : index
    %c0_5 = arith.constant 0 : index
    %13 = vector.load %arg4[%c0_4, %c0_5] : memref<128x128xf32, #tpu.memory_space<vmem>>, vector<128x128xf32>
    tpu.vector_store %arg4[%c0_4, %c0_5], %12 {strides = array<i32>} : memref<128x128xf32, #tpu.memory_space<vmem>>, vector<128x128xf32>,
    return
  }
  func.func @transform_0(%arg0: i32, %arg1: i32) -> (i32, i32) {
    %c0_i32 = arith.constant 0 : i32
    %c0_i32_0 = arith.constant 0 : i32
    return %arg0, %c0_i32 : i32, i32
  }
  func.func @transform_1(%arg0: i32, %arg1: i32) -> (i32, i32) {
    %c0_i32 = arith.constant 0 : i32
    %c0_i32_0 = arith.constant 0 : i32
    return %c0_i32, %arg1 : i32, i32
  }
  func.func @transform_2(%arg0: i32, %arg1: i32) -> (i32, i32) {
    %c0_i32 = arith.constant 0 : i32
    return %arg0, %arg1 : i32, i32
  }
}

</mosaic_0001>

<llo_original>
// kernel: tpu_custom_call.1
$region0: #{tpu_custom_call.1}
  #allocation0 [shape = 'u32[]', space=smem, size = 0x4, offset = 0x4, fixed_abs, tag = 'smem constant byte address 0x4 - core index']
  #allocation1 [shape = 'u32[144,128]{1,0:T(1,128)}', space=vmem, size = 0x12000, scoped, tag = 'internal scratch']
  #allocation2 [shape = 'f32[128,16]{1,0:T(8,128)}', space=vmem, size = 0x10000, scoped, tag = 'scratch operand']
  %s0 = inlined_call_operand.vmem [shape: f32[250,15], index: 0, kind: input, shape index: {}]
  %s1 = inlined_call_operand.vmem [shape: f32[16,1024], index: 1, kind: input, shape index: {}]
  %s2 = inlined_call_operand.hbm [shape: f32[250,256], index: 2, kind: output, shape index: {}]
  %s3 = sld [smem:[#allocation0]]
  $region68: #{tpu_custom_call.1} parent=0
    _
  %s5 = ssub.s32 1, %s3
  %s6 = scalar_select 0, %s5, %s3
  $region1: #{tpu_custom_call.1} parent=0
    #allocation3 [shape = 'u8[65536]{0}', space=vmem, size = 0x10000, scoped, tag = 'input window, operand 1']
    #allocation4 [shape = 'u8[131072]{0}', space=vmem, size = 0x20000, scoped, tag = 'output window, operand 0']
    #allocation5 [shape = 's32[2]{0}', space=sflag, size = 0x8, scoped, tag = 'scoped memory for tpu_custom_call.1']
    %7 = vsyncpa [#allocation5], 0
    %s8 = scalar_lea.sflag [#allocation5], 1
    %9 = vsyncpa %s8, 0
    loop: start=0, step=1, limit=6
    $region2: #{tpu_custom_call.1} parent=1 // loop_pre_header
      _
    $region3: #{tpu_custom_call.1} parent=1 // loop_header
      %s11 = sphi 0, %s15
      %p12 = scmp.ge.s32.totalorder %s11, 6
      %s18 = sphi 0, %s30
      %s19 = sphi 0, %s26
      %s20 = sphi 0, %s18
      %s21 = sphi 0, %s19
      %s22 = sphi 0, %s20
      %s23 = sphi 0, %s21
      %s33 = sphi 0, %s35
      %s36 = sphi 0, %s33
      %s37 = sphi 0, %s36
      %s53 = sphi 0, %s37
      %s59 = sphi 0, %s61
      %s62 = sphi 0, %s59
      %s63 = sphi 0, %s62
      %s79 = sphi 0, %s63
      %s87 = sphi 0, %s89
      %s90 = sphi 0, %s87
      %s91 = sphi 0, %s90
      %s107 = sphi 0, %s91
    $region4: #{tpu_custom_call.1} parent=1 // loop_header_branch
      %14 = sbr.rel (%p12) target = $region8
    $region5: #{tpu_custom_call.1} parent=1 // loop_body
      %s16 = ssub.s32 %s11, 1
      %s17 = ssub.s32 %s11, 2
      %s24 = sadd.s32 1, %s19
      %p25 = scmp.ge.s32.totalorder %s24, 2
      %s26 = scalar_select %p25, 0, %s24
      %s27 = sadd.s32 1, %s18
      %s28 = scalar_select %p25, %s27, %s18
      %p29 = scmp.ge.s32.totalorder %s28, 2
      %s30 = scalar_select %p29, 0, %s28
      %s31 = ssub.s32 %s18, %s30
      %p32 = scmp.eq.s32.totalorder %s31, 0
      %s34 = sadd.s32 %s33, 1
      %s35 = scalar_select %p32, %s33, %s34
      %p38 = pneg %p32
      %p39 = scmp.eq.s32.totalorder %s11, 3
      %p40 = por %p38, %p39
      %p41 = scmp.ne.s32.totalorder %s33, %s36
      %p42 = scmp.eq.s32.totalorder %s11, 0
      %p43 = por %p41, %p42
      %p44 = scmp.ne.s32.totalorder %s33, %s36
      %p45 = scmp.eq.s32.totalorder %s16, 3
      %p46 = por %p44, %p45
      %p47 = scmp.ne.s32.totalorder %s36, %s37
      %p48 = scmp.eq.s32.totalorder %s16, 0
      %p49 = por %p47, %p48
      %p50 = scmp.ne.s32.totalorder %s36, %s37
      %p51 = scmp.eq.s32.totalorder %s17, 3
      %p52 = por %p50, %p51
      %p54 = scmp.ne.s32.totalorder %s37, %s53
      %p55 = scmp.eq.s32.totalorder %s17, 0
      %p56 = por %p54, %p55
      %s57 = ssub.s32 %s19, %s26
      %p58 = scmp.eq.s32.totalorder %s57, 0
      %s60 = sadd.s32 %s59, 1
      %s61 = scalar_select %p58, %s59, %s60
      %p64 = pneg %p58
      %p65 = scmp.eq.s32.totalorder %s11, 3
      %p66 = por %p64, %p65
      %p67 = scmp.ne.s32.totalorder %s59, %s62
      %p68 = scmp.eq.s32.totalorder %s11, 0
      %p69 = por %p67, %p68
      %p70 = scmp.ne.s32.totalorder %s59, %s62
      %p71 = scmp.eq.s32.totalorder %s16, 3
      %p72 = por %p70, %p71
      %p73 = scmp.ne.s32.totalorder %s62, %s63
      %p74 = scmp.eq.s32.totalorder %s16, 0
      %p75 = por %p73, %p74
      %p76 = scmp.ne.s32.totalorder %s62, %s63
      %p77 = scmp.eq.s32.totalorder %s17, 3
      %p78 = por %p76, %p77
      %p80 = scmp.ne.s32.totalorder %s63, %s79
      %p81 = scmp.eq.s32.totalorder %s17, 0
      %p82 = por %p80, %p81
      %s83 = ssub.s32 %s18, %s30
      %s84 = ssub.s32 %s19, %s26
      %s85 = sor.u32 %s83, %s84
      %p86 = scmp.eq.s32.totalorder %s85, 0
      %s88 = sadd.s32 %s87, 1
      %s89 = scalar_select %p86, %s87, %s88
      %p92 = pneg %p86
      %p93 = scmp.eq.s32.totalorder %s11, 3
      %p94 = por %p92, %p93
      %p95 = scmp.ne.s32.totalorder %s87, %s90
      %p96 = scmp.eq.s32.totalorder %s11, 0
      %p97 = por %p95, %p96
      %p98 = scmp.ne.s32.totalorder %s87, %s90
      %p99 = scmp.eq.s32.totalorder %s16, 3
      %p100 = por %p98, %p99
      %p101 = scmp.ne.s32.totalorder %s90, %s91
      %p102 = scmp.eq.s32.totalorder %s16, 0
      %p103 = por %p101, %p102
      %p104 = scmp.ne.s32.totalorder %s90, %s91
      %p105 = scmp.eq.s32.totalorder %s17, 3
      %p106 = por %p104, %p105
      %p108 = scmp.ne.s32.totalorder %s91, %s107
      %p109 = scmp.eq.s32.totalorder %s17, 0
      %p110 = por %p108, %p109
      %p111 = scmp.le.s32.totalorder 1, %s11
      %p112 = scmp.lt.s32.totalorder %s11, 5
      %p113 = pnand %p111, %p112
      %p114 = pneg %p113
      // Predicated region
      $region9: #{tpu_custom_call.1} parent=5 // pred_check
        _
      $region10: #{tpu_custom_call.1} parent=5 // pred_check_branch
        %116 = sbr.rel (%p113) target = $region12
      $region11: #{tpu_custom_call.1} parent=5 // pred_region
        %s117 = ssub.s32 %s11, 1
      $region12: #{tpu_custom_call.1} parent=5 // pred_fallthru
        _
      %p118 = scmp.lt.s32.totalorder %s11, 4
      // Predicated region
      $region13: #{tpu_custom_call.1} parent=5 // pred_check
        %p119 = pneg %p118
      $region14: #{tpu_custom_call.1} parent=5 // pred_check_branch
        %121 = sbr.rel (%p119) target = $region16
      $region15: #{tpu_custom_call.1} parent=5 // pred_region
        // Predicated region
        $region17: #{tpu_custom_call.1} parent=15 // pred_check
          %p122 = pneg %p43
        $region18: #{tpu_custom_call.1} parent=15 // pred_check_branch
          %124 = sbr.rel (%p122) target = $region20
        $region19: #{tpu_custom_call.1} parent=15 // pred_region
          %s125 = smul.u32 16, %s18
          %p126 = scmp.lt.s32.totalorder %s125, 31
          %s127 = scalar_select %p126, %s125, 31
          %s128 = smul.addr %s127, 8
          %s129 = scalar_lea.vmem %s0, %s128
          %s130 = smul.u32 16, %s18
        $region20: #{tpu_custom_call.1} parent=15 // pred_fallthru
          _
        // Predicated region
        $region21: #{tpu_custom_call.1} parent=15 // pred_check
          %p131 = pneg %p69
        $region22: #{tpu_custom_call.1} parent=15 // pred_check_branch
          %133 = sbr.rel (%p131) target = $region24
        $region23: #{tpu_custom_call.1} parent=15 // pred_region
          %s134 = sand.u32 %s59, 1
          %s135 = sand.u32 %s59, 1
          %s136 = smul.addr %s135, 64
          %s137 = scalar_lea.vmem [#allocation3], %s136
          %s138 = smul.u32 4, %s19
          %s139 = smul.addr %s138, 8
          %s140 = scalar_lea.vmem %s1, %s139
          // Predicated region
          $region25: #{tpu_custom_call.1} parent=23 // pred_check
            _
          $region26: #{tpu_custom_call.1} parent=23 // pred_check_branch
            %142 = sbr.rel (0) target = $region28
          $region27: #{tpu_custom_call.1} parent=23 // pred_region
            // Predicated region
            $region29: #{tpu_custom_call.1} parent=27 // pred_check
              _
            $region30: #{tpu_custom_call.1} parent=27 // pred_check_branch
              %144 = sbr.rel (0) target = $region32
            $region31: #{tpu_custom_call.1} parent=27 // pred_region
              loop: start=0, step=1, limit=1
              $region33: #{tpu_custom_call.1} parent=31 // loop_pre_header
                _
              $region34: #{tpu_custom_call.1} parent=31 // loop_header
                %s146 = sphi 0, %s150
                %p147 = scmp.ge.s32.totalorder %s146, 1
                %s151 = sphi %s140, %s140
                %s152 = sphi %s137, %s137
              $region35: #{tpu_custom_call.1} parent=31 // loop_header_branch
                %149 = sbr.rel (%p147) target = $region39
              $region36: #{tpu_custom_call.1} parent=31 // loop_body
                %v153 = vld [vmem:[%s151] sm:$0xff]
                %154 = vst [vmem:[%s152] sm:$0xff] %v153
                %v155 = vld [vmem:[%s151 + $0x8] sm:$0xff]
                %156 = vst [vmem:[%s152 + $0x8] sm:$0xff] %v155
                %v157 = vld [vmem:[%s151 + $0x10] sm:$0xff]
                %158 = vst [vmem:[%s152 + $0x10] sm:$0xff] %v157
                %v159 = vld [vmem:[%s151 + $0x18] sm:$0xff]
                %160 = vst [vmem:[%s152 + $0x18] sm:$0xff] %v159
                %v161 = vld [vmem:[%s151 + $0x40] sm:$0xff]
                %162 = vst [vmem:[%s152 + $0x20] sm:$0xff] %v161
                %v163 = vld [vmem:[%s151 + $0x48] sm:$0xff]
                %164 = vst [vmem:[%s152 + $0x28] sm:$0xff] %v163
                %v165 = vld [vmem:[%s151 + $0x50] sm:$0xff]
                %166 = vst [vmem:[%s152 + $0x30] sm:$0xff] %v165
                %v167 = vld [vmem:[%s151 + $0x58] sm:$0xff]
                %168 = vst [vmem:[%s152 + $0x38] sm:$0xff] %v167
              $region37: #{tpu_custom_call.1} parent=31 // loop_footer
                %s150 = sadd.s32 1, %s146
              $region38: #{tpu_custom_call.1} parent=31 // loop_footer_branch
                %145 = sbr.rel target = $region34
              $region39: #{tpu_custom_call.1} parent=31 // loop_exit
                _
            $region32: #{tpu_custom_call.1} parent=27 // pred_fallthru
              _
            // Predicated region
            $region40: #{tpu_custom_call.1} parent=27 // pred_check
              _
            $region41: #{tpu_custom_call.1} parent=27 // pred_check_branch
              %170 = sbr.rel target = $region43
            $region42: #{tpu_custom_call.1} parent=27 // pred_region
              _
            $region43: #{tpu_custom_call.1} parent=27 // pred_fallthru
              _
          $region28: #{tpu_custom_call.1} parent=23 // pred_fallthru
            _
          %171 = vnop
        $region24: #{tpu_custom_call.1} parent=15 // pred_fallthru
          _
      $region16: #{tpu_custom_call.1} parent=5 // pred_fallthru
        _
      %p172 = scmp.le.s32.totalorder 1, %s11
      %p173 = scmp.lt.s32.totalorder %s11, 5
      %p174 = pnand %p172, %p173
      %p175 = pneg %p174
      // Predicated region
      $region44: #{tpu_custom_call.1} parent=5 // pred_check
        _
      $region45: #{tpu_custom_call.1} parent=5 // pred_check_branch
        %177 = sbr.rel (%p174) target = $region47
      $region46: #{tpu_custom_call.1} parent=5 // pred_region
        %s178 = ssub.s32 %s11, 1
        %s179 = sand.u32 %s62, 1
        %s180 = sand.u32 %s62, 1
        %s181 = smul.addr %s180, 64
        %s182 = scalar_lea.vmem [#allocation3], %s181
        // Predicated region
        $region48: #{tpu_custom_call.1} parent=46 // pred_check
          %p183 = pneg %p75
        $region49: #{tpu_custom_call.1} parent=46 // pred_check_branch
          %185 = sbr.rel (%p183) target = $region51
        $region50: #{tpu_custom_call.1} parent=46 // pred_region
          _
        $region51: #{tpu_custom_call.1} parent=46 // pred_fallthru
          _
        %s186 = smul.u32 16, %s20
        %p187 = scmp.lt.s32.totalorder %s186, 31
        %s188 = scalar_select %p187, %s186, 31
        %s189 = smul.addr %s188, 8
        %s190 = scalar_lea.vmem %s0, %s189
        %p191 = pneg %p49
        %p192 = pneg %p46
        %s193 = sand.u32 %s62, 1
        %s194 = sand.u32 %s62, 1
        %s195 = smul.addr %s194, 64
        %s196 = scalar_lea.vmem [#allocation3], %s195
        %p197 = pneg %p75
        %p198 = pneg %p72
        %p199 = pneg %p103
        %p200 = pneg %p100
        %s201 = sand.u32 %s90, 1
        %s202 = scalar_lea.sflag [#allocation5], %s201
        %s203 = sand.u32 %s90, 1
        %s204 = smul.addr %s203, 128
        %s205 = scalar_lea.vmem [#allocation4], %s204
        %s206 = smul.u32 16, %s20
        %p207 = scmp.lt.s32.totalorder %s206, 31
        %s208 = scalar_select %p207, %s206, 31
        %s209 = smul.addr %s208, 8
        %s210 = scalar_lea.vmem %s0, %s209
        %s211 = smul.u32 16, %s20
        %s212 = smul.u32 4, %s21
        %s213 = smul.u32 16, %s20
        %p214 = scmp.eq.s32.totalorder %s21, 0
        // Predicated region
        $region52: #{tpu_custom_call.1} parent=46 // pred_check
          %p215 = pneg %p214
        $region53: #{tpu_custom_call.1} parent=46 // pred_check_branch
          %217 = sbr.rel (%p215) target = $region55
        $region54: #{tpu_custom_call.1} parent=46 // pred_region
          %v218 = vld [vmem:[%s210] sm:$0xff]
          %v219 = vld [vmem:[%s210 + $0x8] sm:$0xff]
          %v220 = vld [vmem:[%s210 + $0x10] sm:$0xff]
          %v221 = vld [vmem:[%s210 + $0x18] sm:$0xff]
          %v222 = vld [vmem:[%s210 + $0x20] sm:$0xff]
          %v223 = vld [vmem:[%s210 + $0x28] sm:$0xff]
          %v224 = vld [vmem:[%s210 + $0x30] sm:$0xff]
          %v225 = vld [vmem:[%s210 + $0x38] sm:$0xff]
          %v226 = vld [vmem:[%s210 + $0x40] sm:$0xff]
          %v227 = vld [vmem:[%s210 + $0x48] sm:$0xff]
          %v228 = vld [vmem:[%s210 + $0x50] sm:$0xff]
          %v229 = vld [vmem:[%s210 + $0x58] sm:$0xff]
          %v230 = vld [vmem:[%s210 + $0x60] sm:$0xff]
          %v231 = vld [vmem:[%s210 + $0x68] sm:$0xff]
          %v232 = vld [vmem:[%s210 + $0x70] sm:$0xff]
          %v233 = vld [vmem:[%s210 + $0x78] sm:$0xff]
          %v234 = vmul.f32 %v218, 0.2581989
          %v235 = vmul.f32 %v219, 0.2581989
          %v236 = vmul.f32 %v220, 0.2581989
          %v237 = vmul.f32 %v221, 0.2581989
          %v238 = vmul.f32 %v222, 0.2581989
          %v239 = vmul.f32 %v223, 0.2581989
          %v240 = vmul.f32 %v224, 0.2581989
          %v241 = vmul.f32 %v225, 0.2581989
          %v242 = vmul.f32 %v226, 0.2581989
          %v243 = vmul.f32 %v227, 0.2581989
          %v244 = vmul.f32 %v228, 0.2581989
          %v245 = vmul.f32 %v229, 0.2581989
          %v246 = vmul.f32 %v230, 0.2581989
          %v247 = vmul.f32 %v231, 0.2581989
          %v248 = vmul.f32 %v232, 0.2581989
          %v249 = vmul.f32 %v233, 0.2581989
          %v250 = vmul.f32 %v234, %v234
          %v251 = vmul.f32 %v235, %v235
          %v252 = vmul.f32 %v236, %v236
          %v253 = vmul.f32 %v237, %v237
          %v254 = vmul.f32 %v238, %v238
          %v255 = vmul.f32 %v239, %v239
          %v256 = vmul.f32 %v240, %v240
          %v257 = vmul.f32 %v241, %v241
          %v258 = vmul.f32 %v242, %v242
          %v259 = vmul.f32 %v243, %v243
          %v260 = vmul.f32 %v244, %v244
          %v261 = vmul.f32 %v245, %v245
          %v262 = vmul.f32 %v246, %v246
          %v263 = vmul.f32 %v247, %v247
          %v264 = vmul.f32 %v248, %v248
          %v265 = vmul.f32 %v249, %v249
          %vm266 = vcmask 121856
          %v267 = vsel %vm266, %v250, 0.0
          %268 = vadd.xlane.f32.xlu0 %v267
          %v269 = vpop.xlane.xlu0 %268
          %v270 = vsel %vm266, %v251, 0.0
          %271 = vadd.xlane.f32.xlu0 %v270
          %v272 = vpop.xlane.xlu0 %271
          %v273 = vsel %vm266, %v252, 0.0
          %274 = vadd.xlane.f32.xlu0 %v273
          %v275 = vpop.xlane.xlu0 %274
          %v276 = vsel %vm266, %v253, 0.0
          %277 = vadd.xlane.f32.xlu0 %v276
          %v278 = vpop.xlane.xlu0 %277
          %v279 = vsel %vm266, %v254, 0.0
          %280 = vadd.xlane.f32.xlu0 %v279
          %v281 = vpop.xlane.xlu0 %280
          %v282 = vsel %vm266, %v255, 0.0
          %283 = vadd.xlane.f32.xlu0 %v282
          %v284 = vpop.xlane.xlu0 %283
          %v285 = vsel %vm266, %v256, 0.0
          %286 = vadd.xlane.f32.xlu0 %v285
          %v287 = vpop.xlane.xlu0 %286
          %v288 = vsel %vm266, %v257, 0.0
          %289 = vadd.xlane.f32.xlu0 %v288
          %v290 = vpop.xlane.xlu0 %289
          %v291 = vsel %vm266, %v258, 0.0
          %292 = vadd.xlane.f32.xlu0 %v291
          %v293 = vpop.xlane.xlu0 %292
          %v294 = vsel %vm266, %v259, 0.0
          %295 = vadd.xlane.f32.xlu0 %v294
          %v296 = vpop.xlane.xlu0 %295
          %v297 = vsel %vm266, %v260, 0.0
          %298 = vadd.xlane.f32.xlu0 %v297
          %v299 = vpop.xlane.xlu0 %298
          %v300 = vsel %vm266, %v261, 0.0
          %301 = vadd.xlane.f32.xlu0 %v300
          %v302 = vpop.xlane.xlu0 %301
          %v303 = vsel %vm266, %v262, 0.0
          %304 = vadd.xlane.f32.xlu0 %v303
          %v305 = vpop.xlane.xlu0 %304
          %v306 = vsel %vm266, %v263, 0.0
          %307 = vadd.xlane.f32.xlu0 %v306
          %v308 = vpop.xlane.xlu0 %307
          %v309 = vsel %vm266, %v264, 0.0
          %310 = vadd.xlane.f32.xlu0 %v309
          %v311 = vpop.xlane.xlu0 %310
          %v312 = vsel %vm266, %v265, 0.0
          %313 = vadd.xlane.f32.xlu0 %v312
          %v314 = vpop.xlane.xlu0 %313
          %v315 = vmul.f32 %v269, 0.5
          %v316 = vmul.f32 %v272, 0.5
          %v317 = vmul.f32 %v275, 0.5
          %v318 = vmul.f32 %v278, 0.5
          %v319 = vmul.f32 %v281, 0.5
          %v320 = vmul.f32 %v284, 0.5
          %v321 = vmul.f32 %v287, 0.5
          %v322 = vmul.f32 %v290, 0.5
          %v323 = vmul.f32 %v293, 0.5
          %v324 = vmul.f32 %v296, 0.5
          %v325 = vmul.f32 %v299, 0.5
          %v326 = vmul.f32 %v302, 0.5
          %v327 = vmul.f32 %v305, 0.5
          %v328 = vmul.f32 %v308, 0.5
          %v329 = vmul.f32 %v311, 0.5
          %v330 = vmul.f32 %v314, 0.5
          %v331 = vsub.f32 -2.7725887, %v315
          %v332 = vsub.f32 -2.7725887, %v316
          %v333 = vsub.f32 -2.7725887, %v317
          %v334 = vsub.f32 -2.7725887, %v318
          %v335 = vsub.f32 -2.7725887, %v319
          %v336 = vsub.f32 -2.7725887, %v320
          %v337 = vsub.f32 -2.7725887, %v321
          %v338 = vsub.f32 -2.7725887, %v322
          %v339 = vsub.f32 -2.7725887, %v323
          %v340 = vsub.f32 -2.7725887, %v324
          %v341 = vsub.f32 -2.7725887, %v325
          %v342 = vsub.f32 -2.7725887, %v326
          %v343 = vsub.f32 -2.7725887, %v327
          %v344 = vsub.f32 -2.7725887, %v328
          %v345 = vsub.f32 -2.7725887, %v329
          %v346 = vsub.f32 -2.7725887, %v330
          %v347 = vmul.f32 %v331, 0.25
          %v348 = vmul.f32 %v332, 0.25
          %v349 = vmul.f32 %v333, 0.25
          %v350 = vmul.f32 %v334, 0.25
          %v351 = vmul.f32 %v335, 0.25
          %v352 = vmul.f32 %v336, 0.25
          %v353 = vmul.f32 %v337, 0.25
          %v354 = vmul.f32 %v338, 0.25
          %v355 = vmul.f32 %v339, 0.25
          %v356 = vmul.f32 %v340, 0.25
          %v357 = vmul.f32 %v341, 0.25
          %v358 = vmul.f32 %v342, 0.25
          %v359 = vmul.f32 %v343, 0.25
          %v360 = vmul.f32 %v344, 0.25
          %v361 = vmul.f32 %v345, 0.25
          %v362 = vmul.f32 %v346, 0.25
          %v363 = vmul.f32 %v347, 1.442695
          %v364 = vpow.pop %v363
          %v365 = vmul.f32 %v348, 1.442695
          %v366 = vpow.pop %v365
          %v367 = vmul.f32 %v349, 1.442695
          %v368 = vpow.pop %v367
          %v369 = vmul.f32 %v350, 1.442695
          %v370 = vpow.pop %v369
          %v371 = vmul.f32 %v351, 1.442695
          %v372 = vpow.pop %v371
          %v373 = vmul.f32 %v352, 1.442695
          %v374 = vpow.pop %v373
          %v375 = vmul.f32 %v353, 1.442695
          %v376 = vpow.pop %v375
          %v377 = vmul.f32 %v354, 1.442695
          %v378 = vpow.pop %v377
          %v379 = vmul.f32 %v355, 1.442695
          %v380 = vpow.pop %v379
          %v381 = vmul.f32 %v356, 1.442695
          %v382 = vpow.pop %v381
          %v383 = vmul.f32 %v357, 1.442695
          %v384 = vpow.pop %v383
          %v385 = vmul.f32 %v358, 1.442695
          %v386 = vpow.pop %v385
          %v387 = vmul.f32 %v359, 1.442695
          %v388 = vpow.pop %v387
          %v389 = vmul.f32 %v360, 1.442695
          %v390 = vpow.pop %v389
          %v391 = vmul.f32 %v361, 1.442695
          %v392 = vpow.pop %v391
          %v393 = vmul.f32 %v362, 1.442695
          %v394 = vpow.pop %v393
          %vm395 = vcmask 130048
          %396 = vst.msk [vmem:[#allocation2] sm:$0xff] %vm395, %v364
          %397 = vst.msk [vmem:[#allocation2 + $0x8] sm:$0xff] %vm395, %v366
          %398 = vst.msk [vmem:[#allocation2 + $0x10] sm:$0xff] %vm395, %v368
          %399 = vst.msk [vmem:[#allocation2 + $0x18] sm:$0xff] %vm395, %v370
          %400 = vst.msk [vmem:[#allocation2 + $0x20] sm:$0xff] %vm395, %v372
          %401 = vst.msk [vmem:[#allocation2 + $0x28] sm:$0xff] %vm395, %v374
          %402 = vst.msk [vmem:[#allocation2 + $0x30] sm:$0xff] %vm395, %v376
          %403 = vst.msk [vmem:[#allocation2 + $0x38] sm:$0xff] %vm395, %v378
          %404 = vst.msk [vmem:[#allocation2 + $0x40] sm:$0xff] %vm395, %v380
          %405 = vst.msk [vmem:[#allocation2 + $0x48] sm:$0xff] %vm395, %v382
          %406 = vst.msk [vmem:[#allocation2 + $0x50] sm:$0xff] %vm395, %v384
          %407 = vst.msk [vmem:[#allocation2 + $0x58] sm:$0xff] %vm395, %v386
          %408 = vst.msk [vmem:[#allocation2 + $0x60] sm:$0xff] %vm395, %v388
          %409 = vst.msk [vmem:[#allocation2 + $0x68] sm:$0xff] %vm395, %v390
          %410 = vst.msk [vmem:[#allocation2 + $0x70] sm:$0xff] %vm395, %v392
          %411 = vst.msk [vmem:[#allocation2 + $0x78] sm:$0xff] %vm395, %v394
          %v412 = vmul.f32 %v364, 0.5
          %v413 = vmul.f32 %v366, 0.5
          %v414 = vmul.f32 %v368, 0.5
          %v415 = vmul.f32 %v370, 0.5
          %v416 = vmul.f32 %v372, 0.5
          %v417 = vmul.f32 %v374, 0.5
          %v418 = vmul.f32 %v376, 0.5
          %v419 = vmul.f32 %v378, 0.5
          %v420 = vmul.f32 %v380, 0.5
          %v421 = vmul.f32 %v382, 0.5
          %v422 = vmul.f32 %v384, 0.5
          %v423 = vmul.f32 %v386, 0.5
          %v424 = vmul.f32 %v388, 0.5
          %v425 = vmul.f32 %v390, 0.5
          %v426 = vmul.f32 %v392, 0.5
          %v427 = vmul.f32 %v394, 0.5
          %v428 = vmul.f32 %v234, %v412
          %v429 = vmul.f32 %v235, %v413
          %v430 = vmul.f32 %v236, %v414
          %v431 = vmul.f32 %v237, %v415
          %v432 = vmul.f32 %v238, %v416
          %v433 = vmul.f32 %v239, %v417
          %v434 = vmul.f32 %v240, %v418
          %v435 = vmul.f32 %v241, %v419
          %v436 = vmul.f32 %v242, %v420
          %v437 = vmul.f32 %v243, %v421
          %v438 = vmul.f32 %v244, %v422
          %v439 = vmul.f32 %v245, %v423
          %v440 = vmul.f32 %v246, %v424
          %v441 = vmul.f32 %v247, %v425
          %v442 = vmul.f32 %v248, %v426
          %v443 = vmul.f32 %v249, %v427
          %444 = vst.msk [vmem:[#allocation2] sm:$0xff] %vm266, %v428
          %445 = vst.msk [vmem:[#allocation2 + $0x8] sm:$0xff] %vm266, %v429
          %446 = vst.msk [vmem:[#allocation2 + $0x10] sm:$0xff] %vm266, %v430
          %447 = vst.msk [vmem:[#allocation2 + $0x18] sm:$0xff] %vm266, %v431
          %448 = vst.msk [vmem:[#allocation2 + $0x20] sm:$0xff] %vm266, %v432
          %449 = vst.msk [vmem:[#allocation2 + $0x28] sm:$0xff] %vm266, %v433
          %450 = vst.msk [vmem:[#allocation2 + $0x30] sm:$0xff] %vm266, %v434
          %451 = vst.msk [vmem:[#allocation2 + $0x38] sm:$0xff] %vm266, %v435
          %452 = vst.msk [vmem:[#allocation2 + $0x40] sm:$0xff] %vm266, %v436
          %453 = vst.msk [vmem:[#allocation2 + $0x48] sm:$0xff] %vm266, %v437
          %454 = vst.msk [vmem:[#allocation2 + $0x50] sm:$0xff] %vm266, %v438
          %455 = vst.msk [vmem:[#allocation2 + $0x58] sm:$0xff] %vm266, %v439
          %456 = vst.msk [vmem:[#allocation2 + $0x60] sm:$0xff] %vm266, %v440
          %457 = vst.msk [vmem:[#allocation2 + $0x68] sm:$0xff] %vm266, %v441
          %458 = vst.msk [vmem:[#allocation2 + $0x70] sm:$0xff] %vm266, %v442
          %459 = vst.msk [vmem:[#allocation2 + $0x78] sm:$0xff] %vm266, %v443
        $region55: #{tpu_custom_call.1} parent=46 // pred_fallthru
          _
        %v460 = vld [vmem:[#allocation2] sm:$0xff]
        %v461 = vld [vmem:[#allocation2 + $0x8] sm:$0xff]
        %v462 = vld [vmem:[#allocation2 + $0x10] sm:$0xff]
        %v463 = vld [vmem:[#allocation2 + $0x18] sm:$0xff]
        %v464 = vld [vmem:[#allocation2 + $0x20] sm:$0xff]
        %v465 = vld [vmem:[#allocation2 + $0x28] sm:$0xff]
        %v466 = vld [vmem:[#allocation2 + $0x30] sm:$0xff]
        %v467 = vld [vmem:[#allocation2 + $0x38] sm:$0xff]
        %v468 = vld [vmem:[#allocation2 + $0x40] sm:$0xff]
        %v469 = vld [vmem:[#allocation2 + $0x48] sm:$0xff]
        %v470 = vld [vmem:[#allocation2 + $0x50] sm:$0xff]
        %v471 = vld [vmem:[#allocation2 + $0x58] sm:$0xff]
        %v472 = vld [vmem:[#allocation2 + $0x60] sm:$0xff]
        %v473 = vld [vmem:[#allocation2 + $0x68] sm:$0xff]
        %v474 = vld [vmem:[#allocation2 + $0x70] sm:$0xff]
        %v475 = vld [vmem:[#allocation2 + $0x78] sm:$0xff]
        %v476 = vld [vmem:[%s182] sm:$0xff]
        %v477 = vld [vmem:[%s182 + $0x8] sm:$0xff]
        %v478 = vld [vmem:[%s182 + $0x10] sm:$0xff]
        %v479 = vld [vmem:[%s182 + $0x18] sm:$0xff]
        %v480 = vld [vmem:[%s182 + $0x20] sm:$0xff]
        %v481 = vld [vmem:[%s182 + $0x28] sm:$0xff]
        %v482 = vld [vmem:[%s182 + $0x30] sm:$0xff]
        %v483 = vld [vmem:[%s182 + $0x38] sm:$0xff]
        %vm484 = vcmask 130048
        %v486 = vsel %vm484, %v460, 0
        %v489 = vsel %vm484, %v461, 0
        %v492 = vsel %vm484, %v462, 0
        %v495 = vsel %vm484, %v463, 0
        %v498 = vsel %vm484, %v464, 0
        %v501 = vsel %vm484, %v465, 0
        %v504 = vsel %vm484, %v466, 0
        %v507 = vsel %vm484, %v467, 0
        %v510 = vsel %vm484, %v468, 0
        %v513 = vsel %vm484, %v469, 0
        %v516 = vsel %vm484, %v470, 0
        %v519 = vsel %vm484, %v471, 0
        %v522 = vsel %vm484, %v472, 0
        %v525 = vsel %vm484, %v473, 0
        %v528 = vsel %vm484, %v474, 0
        %v531 = vsel %vm484, %v475, 0
        %533 = vmatprep.subr.mxu0 %v477
        %534 = vmatpush1.msra.mxu0 %v476
        %535 = vmatprep.subr.mxu0 %v481
        %536 = vmatpush1.msra.mxu0 %v480
        %537 = vmatprep.subr.mxu0 0.0
        %538 = vmatpush1.msra.mxu0 0.0
        %539 = vmatprep.subr.mxu0 0.0
        %540 = vmatpush1.msra.mxu0 0.0
        %541 = vmatprep.subr.mxu0 0.0
        %542 = vmatpush1.msra.mxu0 0.0
        %543 = vmatprep.subr.mxu0 0.0
        %544 = vmatpush1.msra.mxu0 0.0
        %545 = vmatprep.subr.mxu0 0.0
        %546 = vmatpush1.msra.mxu0 0.0
        %547 = vmatprep.subr.mxu0 0.0
        %548 = vmatpush1.msra.mxu0 0.0
        %549 = vmatprep.subr.mxu0 0.0
        %550 = vmatpush1.msra.mxu0 0.0
        %551 = vmatprep.subr.mxu0 0.0
        %552 = vmatpush1.msra.mxu0 0.0
        %553 = vmatprep.subr.mxu0 0.0
        %554 = vmatpush1.msra.mxu0 0.0
        %555 = vmatprep.subr.mxu0 0.0
        %556 = vmatpush1.msra.mxu0 0.0
        %557 = vmatprep.subr.mxu0 0.0
        %558 = vmatpush1.msra.mxu0 0.0
        %559 = vmatprep.subr.mxu0 0.0
        %560 = vmatpush1.msra.mxu0 0.0
        %561 = vmatprep.subr.mxu0 0.0
        %562 = vmatpush1.msra.mxu0 0.0
        %563 = vmatprep.subr.mxu0 0.0
        %564 = vmatpush1.msra.mxu0 0.0
        %565 = vmatprep.subr.mxu0 0.0
        %566 = vmatpush1.msra.mxu0 0.0
        %567 = vmatprep.subr.mxu0 0.0
        %568 = vmatpush1.msra.mxu0 0.0
        %569 = vmatprep.subr.mxu0 0.0
        %570 = vmatpush1.msra.mxu0 0.0
        %571 = vmatprep.subr.mxu0 0.0
        %572 = vmatpush1.msra.mxu0 0.0
        %573 = vmatprep.subr.mxu0 0.0
        %574 = vmatpush1.msra.mxu0 0.0
        %575 = vmatprep.subr.mxu0 0.0
        %576 = vmatpush1.msra.mxu0 0.0
        %577 = vmatprep.subr.mxu0 0.0
        %578 = vmatpush1.msra.mxu0 0.0
        %579 = vmatprep.subr.mxu0 0.0
        %580 = vmatpush1.msra.mxu0 0.0
        %581 = vmatprep.subr.mxu0 0.0
        %582 = vmatpush1.msra.mxu0 0.0
        %583 = vmatprep.subr.mxu0 0.0
        %584 = vmatpush1.msra.mxu0 0.0
        %585 = vmatprep.subr.mxu0 0.0
        %586 = vmatpush1.msra.mxu0 0.0
        %587 = vmatprep.subr.mxu0 0.0
        %588 = vmatpush1.msra.mxu0 0.0
        %589 = vmatprep.subr.mxu0 0.0
        %590 = vmatpush1.msra.mxu0 0.0
        %591 = vmatprep.subr.mxu0 0.0
        %592 = vmatpush1.msra.mxu0 0.0
        %593 = vmatprep.subr.mxu0 0.0
        %594 = vmatpush1.msra.mxu0 0.0
        %595 = vmatprep.subr.mxu0 0.0
        %596 = vmatpush1.msra.mxu0 0.0
        %597 = vmatprep.mubr.f32.mxu0 0.0
        %598 = vmatmul.mubr.f32.gmra.mrb[0].mxu0 %v486
        %v599 = vpop.f32.mrb[0].mxu0
        %v600 = vadd.f32 0.0, %v599
        %v601 = vpop.f32.mrb[0].mxu0
        %v602 = vadd.f32 0.0, %v601
        %603 = vmatprep.mubr.f32.mxu0 0.0
        %604 = vmatmul.mubr.f32.gmra.mrb[0].mxu0 %v489
        %v605 = vpop.f32.mrb[0].mxu0
        %v606 = vadd.f32 0.0, %v605
        %v607 = vpop.f32.mrb[0].mxu0
        %v608 = vadd.f32 0.0, %v607
        %609 = vmatprep.mubr.f32.mxu0 0.0
        %610 = vmatmul.mubr.f32.gmra.mrb[0].mxu0 %v492
        %v611 = vpop.f32.mrb[0].mxu0
        %v612 = vadd.f32 0.0, %v611
        %v613 = vpop.f32.mrb[0].mxu0
        %v614 = vadd.f32 0.0, %v613
        %615 = vmatprep.mubr.f32.mxu0 0.0
        %616 = vmatmul.mubr.f32.gmra.mrb[0].mxu0 %v495
        %v617 = vpop.f32.mrb[0].mxu0
        %v618 = vadd.f32 0.0, %v617
        %v619 = vpop.f32.mrb[0].mxu0
        %v620 = vadd.f32 0.0, %v619
        %621 = vmatprep.mubr.f32.mxu0 0.0
        %622 = vmatmul.mubr.f32.gmra.mrb[0].mxu0 %v498
        %v623 = vpop.f32.mrb[0].mxu0
        %v624 = vadd.f32 0.0, %v623
        %v625 = vpop.f32.mrb[0].mxu0
        %v626 = vadd.f32 0.0, %v625
        %627 = vmatprep.mubr.f32.mxu0 0.0
        %628 = vmatmul.mubr.f32.gmra.mrb[0].mxu0 %v501
        %v629 = vpop.f32.mrb[0].mxu0
        %v630 = vadd.f32 0.0, %v629
        %v631 = vpop.f32.mrb[0].mxu0
        %v632 = vadd.f32 0.0, %v631
        %633 = vmatprep.mubr.f32.mxu0 0.0
        %634 = vmatmul.mubr.f32.gmra.mrb[0].mxu0 %v504
        %v635 = vpop.f32.mrb[0].mxu0
        %v636 = vadd.f32 0.0, %v635
        %v637 = vpop.f32.mrb[0].mxu0
        %v638 = vadd.f32 0.0, %v637
        %639 = vmatprep.mubr.f32.mxu0 0.0
        %640 = vmatmul.mubr.f32.gmra.mrb[0].mxu0 %v507
        %v641 = vpop.f32.mrb[0].mxu0
        %v642 = vadd.f32 0.0, %v641
        %v643 = vpop.f32.mrb[0].mxu0
        %v644 = vadd.f32 0.0, %v643
        %645 = vmatprep.mubr.f32.mxu0 0.0
        %646 = vmatmul.mubr.f32.gmra.mrb[0].mxu0 %v510
        %v647 = vpop.f32.mrb[0].mxu0
        %v648 = vadd.f32 0.0, %v647
        %v649 = vpop.f32.mrb[0].mxu0
        %v650 = vadd.f32 0.0, %v649
        %651 = vmatprep.mubr.f32.mxu0 0.0
        %652 = vmatmul.mubr.f32.gmra.mrb[0].mxu0 %v513
        %v653 = vpop.f32.mrb[0].mxu0
        %v654 = vadd.f32 0.0, %v653
        %v655 = vpop.f32.mrb[0].mxu0
        %v656 = vadd.f32 0.0, %v655
        %657 = vmatprep.mubr.f32.mxu0 0.0
        %658 = vmatmul.mubr.f32.gmra.mrb[0].mxu0 %v516
        %v659 = vpop.f32.mrb[0].mxu0
        %v660 = vadd.f32 0.0, %v659
        %v661 = vpop.f32.mrb[0].mxu0
        %v662 = vadd.f32 0.0, %v661
        %663 = vmatprep.mubr.f32.mxu0 0.0
        %664 = vmatmul.mubr.f32.gmra.mrb[0].mxu0 %v519
        %v665 = vpop.f32.mrb[0].mxu0
        %v666 = vadd.f32 0.0, %v665
        %v667 = vpop.f32.mrb[0].mxu0
        %v668 = vadd.f32 0.0, %v667
        %669 = vmatprep.mubr.f32.mxu0 0.0
        %670 = vmatmul.mubr.f32.gmra.mrb[0].mxu0 %v522
        %v671 = vpop.f32.mrb[0].mxu0
        %v672 = vadd.f32 0.0, %v671
        %v673 = vpop.f32.mrb[0].mxu0
        %v674 = vadd.f32 0.0, %v673
        %675 = vmatprep.mubr.f32.mxu0 0.0
        %676 = vmatmul.mubr.f32.gmra.mrb[0].mxu0 %v525
        %v677 = vpop.f32.mrb[0].mxu0
        %v678 = vadd.f32 0.0, %v677
        %v679 = vpop.f32.mrb[0].mxu0
        %v680 = vadd.f32 0.0, %v679
        %681 = vmatprep.mubr.f32.mxu0 0.0
        %682 = vmatmul.mubr.f32.gmra.mrb[0].mxu0 %v528
        %v683 = vpop.f32.mrb[0].mxu0
        %v684 = vadd.f32 0.0, %v683
        %v685 = vpop.f32.mrb[0].mxu0
        %v686 = vadd.f32 0.0, %v685
        %687 = vmatprep.mubr.f32.mxu0 0.0
        %688 = vmatmul.mubr.f32.gmra.mrb[0].mxu0 %v531
        %v689 = vpop.f32.mrb[0].mxu0
        %v690 = vadd.f32 0.0, %v689
        %v691 = vpop.f32.mrb[0].mxu0
        %v692 = vadd.f32 0.0, %v691
        %693 = vdwg.mxu0
        %694 = vmatprep.subr.mxu0 %v479
        %695 = vmatpush1.msra.mxu0 %v478
        %696 = vmatprep.subr.mxu0 %v483
        %697 = vmatpush1.msra.mxu0 %v482
        %698 = vmatprep.subr.mxu0 0.0
        %699 = vmatpush1.msra.mxu0 0.0
        %700 = vmatprep.subr.mxu0 0.0
        %701 = vmatpush1.msra.mxu0 0.0
        %702 = vmatprep.subr.mxu0 0.0
        %703 = vmatpush1.msra.mxu0 0.0
        %704 = vmatprep.subr.mxu0 0.0
        %705 = vmatpush1.msra.mxu0 0.0
        %706 = vmatprep.subr.mxu0 0.0
        %707 = vmatpush1.msra.mxu0 0.0
        %708 = vmatprep.subr.mxu0 0.0
        %709 = vmatpush1.msra.mxu0 0.0
        %710 = vmatprep.subr.mxu0 0.0
        %711 = vmatpush1.msra.mxu0 0.0
        %712 = vmatprep.subr.mxu0 0.0
        %713 = vmatpush1.msra.mxu0 0.0
        %714 = vmatprep.subr.mxu0 0.0
        %715 = vmatpush1.msra.mxu0 0.0
        %716 = vmatprep.subr.mxu0 0.0
        %717 = vmatpush1.msra.mxu0 0.0
        %718 = vmatprep.subr.mxu0 0.0
        %719 = vmatpush1.msra.mxu0 0.0
        %720 = vmatprep.subr.mxu0 0.0
        %721 = vmatpush1.msra.mxu0 0.0
        %722 = vmatprep.subr.mxu0 0.0
        %723 = vmatpush1.msra.mxu0 0.0
        %724 = vmatprep.subr.mxu0 0.0
        %725 = vmatpush1.msra.mxu0 0.0
        %726 = vmatprep.subr.mxu0 0.0
        %727 = vmatpush1.msra.mxu0 0.0
        %728 = vmatprep.subr.mxu0 0.0
        %729 = vmatpush1.msra.mxu0 0.0
        %730 = vmatprep.subr.mxu0 0.0
        %731 = vmatpush1.msra.mxu0 0.0
        %732 = vmatprep.subr.mxu0 0.0
        %733 = vmatpush1.msra.mxu0 0.0
        %734 = vmatprep.subr.mxu0 0.0
        %735 = vmatpush1.msra.mxu0 0.0
        %736 = vmatprep.subr.mxu0 0.0
        %737 = vmatpush1.msra.mxu0 0.0
        %738 = vmatprep.subr.mxu0 0.0
        %739 = vmatpush1.msra.mxu0 0.0
        %740 = vmatprep.subr.mxu0 0.0
        %741 = vmatpush1.msra.mxu0 0.0
        %742 = vmatprep.subr.mxu0 0.0
        %743 = vmatpush1.msra.mxu0 0.0
        %744 = vmatprep.subr.mxu0 0.0
        %745 = vmatpush1.msra.mxu0 0.0
        %746 = vmatprep.subr.mxu0 0.0
        %747 = vmatpush1.msra.mxu0 0.0
        %748 = vmatprep.subr.mxu0 0.0
        %749 = vmatpush1.msra.mxu0 0.0
        %750 = vmatprep.subr.mxu0 0.0
        %751 = vmatpush1.msra.mxu0 0.0
        %752 = vmatprep.subr.mxu0 0.0
        %753 = vmatpush1.msra.mxu0 0.0
        %754 = vmatprep.subr.mxu0 0.0
        %755 = vmatpush1.msra.mxu0 0.0
        %756 = vmatprep.subr.mxu0 0.0
        %757 = vmatpush1.msra.mxu0 0.0
        %758 = vmatprep.mubr.f32.mxu0 0.0
        %759 = vmatmul.mubr.f32.gmra.mrb[0].mxu0 %v486
        %v760 = vpop.f32.mrb[0].mxu0
        %v761 = vadd.f32 0.0, %v760
        %v762 = vpop.f32.mrb[0].mxu0
        %v763 = vadd.f32 0.0, %v762
        %764 = vmatprep.mubr.f32.mxu0 0.0
        %765 = vmatmul.mubr.f32.gmra.mrb[0].mxu0 %v489
        %v766 = vpop.f32.mrb[0].mxu0
        %v767 = vadd.f32 0.0, %v766
        %v768 = vpop.f32.mrb[0].mxu0
        %v769 = vadd.f32 0.0, %v768
        %770 = vmatprep.mubr.f32.mxu0 0.0
        %771 = vmatmul.mubr.f32.gmra.mrb[0].mxu0 %v492
        %v772 = vpop.f32.mrb[0].mxu0
        %v773 = vadd.f32 0.0, %v772
        %v774 = vpop.f32.mrb[0].mxu0
        %v775 = vadd.f32 0.0, %v774
        %776 = vmatprep.mubr.f32.mxu0 0.0
        %777 = vmatmul.mubr.f32.gmra.mrb[0].mxu0 %v495
        %v778 = vpop.f32.mrb[0].mxu0
        %v779 = vadd.f32 0.0, %v778
        %v780 = vpop.f32.mrb[0].mxu0
        %v781 = vadd.f32 0.0, %v780
        %782 = vmatprep.mubr.f32.mxu0 0.0
        %783 = vmatmul.mubr.f32.gmra.mrb[0].mxu0 %v498
        %v784 = vpop.f32.mrb[0].mxu0
        %v785 = vadd.f32 0.0, %v784
        %v786 = vpop.f32.mrb[0].mxu0
        %v787 = vadd.f32 0.0, %v786
        %788 = vmatprep.mubr.f32.mxu0 0.0
        %789 = vmatmul.mubr.f32.gmra.mrb[0].mxu0 %v501
        %v790 = vpop.f32.mrb[0].mxu0
        %v791 = vadd.f32 0.0, %v790
        %v792 = vpop.f32.mrb[0].mxu0
        %v793 = vadd.f32 0.0, %v792
        %794 = vmatprep.mubr.f32.mxu0 0.0
        %795 = vmatmul.mubr.f32.gmra.mrb[0].mxu0 %v504
        %v796 = vpop.f32.mrb[0].mxu0
        %v797 = vadd.f32 0.0, %v796
        %v798 = vpop.f32.mrb[0].mxu0
        %v799 = vadd.f32 0.0, %v798
        %800 = vmatprep.mubr.f32.mxu0 0.0
        %801 = vmatmul.mubr.f32.gmra.mrb[0].mxu0 %v507
        %v802 = vpop.f32.mrb[0].mxu0
        %v803 = vadd.f32 0.0, %v802
        %v804 = vpop.f32.mrb[0].mxu0
        %v805 = vadd.f32 0.0, %v804
        %806 = vmatprep.mubr.f32.mxu0 0.0
        %807 = vmatmul.mubr.f32.gmra.mrb[0].mxu0 %v510
        %v808 = vpop.f32.mrb[0].mxu0
        %v809 = vadd.f32 0.0, %v808
        %v810 = vpop.f32.mrb[0].mxu0
        %v811 = vadd.f32 0.0, %v810
        %812 = vmatprep.mubr.f32.mxu0 0.0
        %813 = vmatmul.mubr.f32.gmra.mrb[0].mxu0 %v513
        %v814 = vpop.f32.mrb[0].mxu0
        %v815 = vadd.f32 0.0, %v814
        %v816 = vpop.f32.mrb[0].mxu0
        %v817 = vadd.f32 0.0, %v816
        %818 = vmatprep.mubr.f32.mxu0 0.0
        %819 = vmatmul.mubr.f32.gmra.mrb[0].mxu0 %v516
        %v820 = vpop.f32.mrb[0].mxu0
        %v821 = vadd.f32 0.0, %v820
        %v822 = vpop.f32.mrb[0].mxu0
        %v823 = vadd.f32 0.0, %v822
        %824 = vmatprep.mubr.f32.mxu0 0.0
        %825 = vmatmul.mubr.f32.gmra.mrb[0].mxu0 %v519
        %v826 = vpop.f32.mrb[0].mxu0
        %v827 = vadd.f32 0.0, %v826
        %v828 = vpop.f32.mrb[0].mxu0
        %v829 = vadd.f32 0.0, %v828
        %830 = vmatprep.mubr.f32.mxu0 0.0
        %831 = vmatmul.mubr.f32.gmra.mrb[0].mxu0 %v522
        %v832 = vpop.f32.mrb[0].mxu0
        %v833 = vadd.f32 0.0, %v832
        %v834 = vpop.f32.mrb[0].mxu0
        %v835 = vadd.f32 0.0, %v834
        %836 = vmatprep.mubr.f32.mxu0 0.0
        %837 = vmatmul.mubr.f32.gmra.mrb[0].mxu0 %v525
        %v838 = vpop.f32.mrb[0].mxu0
        %v839 = vadd.f32 0.0, %v838
        %v840 = vpop.f32.mrb[0].mxu0
        %v841 = vadd.f32 0.0, %v840
        %842 = vmatprep.mubr.f32.mxu0 0.0
        %843 = vmatmul.mubr.f32.gmra.mrb[0].mxu0 %v528
        %v844 = vpop.f32.mrb[0].mxu0
        %v845 = vadd.f32 0.0, %v844
        %v846 = vpop.f32.mrb[0].mxu0
        %v847 = vadd.f32 0.0, %v846
        %848 = vmatprep.mubr.f32.mxu0 0.0
        %849 = vmatmul.mubr.f32.gmra.mrb[0].mxu0 %v531
        %v850 = vpop.f32.mrb[0].mxu0
        %v851 = vadd.f32 0.0, %v850
        %v852 = vpop.f32.mrb[0].mxu0
        %v853 = vadd.f32 0.0, %v852
        %854 = vdwg.mxu0
        %v855 = vmul.f32 %v600, %v602
        %v856 = vmul.f32 %v606, %v608
        %v857 = vmul.f32 %v612, %v614
        %v858 = vmul.f32 %v618, %v620
        %v859 = vmul.f32 %v624, %v626
        %v860 = vmul.f32 %v630, %v632
        %v861 = vmul.f32 %v636, %v638
        %v862 = vmul.f32 %v642, %v644
        %v863 = vmul.f32 %v648, %v650
        %v864 = vmul.f32 %v654, %v656
        %v865 = vmul.f32 %v660, %v662
        %v866 = vmul.f32 %v666, %v668
        %v867 = vmul.f32 %v672, %v674
        %v868 = vmul.f32 %v678, %v680
        %v869 = vmul.f32 %v684, %v686
        %v870 = vmul.f32 %v690, %v692
        %v871 = vmul.f32 %v855, %v761
        %v872 = vmul.f32 %v856, %v767
        %v873 = vmul.f32 %v857, %v773
        %v874 = vmul.f32 %v858, %v779
        %v875 = vmul.f32 %v859, %v785
        %v876 = vmul.f32 %v860, %v791
        %v877 = vmul.f32 %v861, %v797
        %v878 = vmul.f32 %v862, %v803
        %v879 = vmul.f32 %v863, %v809
        %v880 = vmul.f32 %v864, %v815
        %v881 = vmul.f32 %v865, %v821
        %v882 = vmul.f32 %v866, %v827
        %v883 = vmul.f32 %v867, %v833
        %v884 = vmul.f32 %v868, %v839
        %v885 = vmul.f32 %v869, %v845
        %v886 = vmul.f32 %v870, %v851
        %v887 = vmul.f32 %v871, %v763
        %v888 = vmul.f32 %v872, %v769
        %v889 = vmul.f32 %v873, %v775
        %v890 = vmul.f32 %v874, %v781
        %v891 = vmul.f32 %v875, %v787
        %v892 = vmul.f32 %v876, %v793
        %v893 = vmul.f32 %v877, %v799
        %v894 = vmul.f32 %v878, %v805
        %v895 = vmul.f32 %v879, %v811
        %v896 = vmul.f32 %v880, %v817
        %v897 = vmul.f32 %v881, %v823
        %v898 = vmul.f32 %v882, %v829
        %v899 = vmul.f32 %v883, %v835
        %v900 = vmul.f32 %v884, %v841
        %v901 = vmul.f32 %v885, %v847
        %v902 = vmul.f32 %v886, %v853
        %903 = vst [vmem:[%s205] sm:$0xff] %v887
        %904 = vst [vmem:[%s205 + $0x8] sm:$0xff] %v888
        %905 = vst [vmem:[%s205 + $0x10] sm:$0xff] %v889
        %906 = vst [vmem:[%s205 + $0x18] sm:$0xff] %v890
        %907 = vst [vmem:[%s205 + $0x20] sm:$0xff] %v891
        %908 = vst [vmem:[%s205 + $0x28] sm:$0xff] %v892
        %909 = vst [vmem:[%s205 + $0x30] sm:$0xff] %v893
        %910 = vst [vmem:[%s205 + $0x38] sm:$0xff] %v894
        %911 = vst [vmem:[%s205 + $0x40] sm:$0xff] %v895
        %912 = vst [vmem:[%s205 + $0x48] sm:$0xff] %v896
        %913 = vst [vmem:[%s205 + $0x50] sm:$0xff] %v897
        %914 = vst [vmem:[%s205 + $0x58] sm:$0xff] %v898
        %915 = vst [vmem:[%s205 + $0x60] sm:$0xff] %v899
        %916 = vst [vmem:[%s205 + $0x68] sm:$0xff] %v900
        %917 = vst [vmem:[%s205 + $0x70] sm:$0xff] %v901
        %918 = vst [vmem:[%s205 + $0x78] sm:$0xff] %v902
        %s919 = sand.u32 %s90, 1
        %s920 = scalar_lea.sflag [#allocation5], %s919
        %s921 = sand.u32 %s90, 1
        %s922 = smul.addr %s921, 128
        %s923 = scalar_lea.vmem [#allocation4], %s922
        // Predicated region
        $region56: #{tpu_custom_call.1} parent=46 // pred_check
          %p924 = pneg %p100
        $region57: #{tpu_custom_call.1} parent=46 // pred_check_branch
          %926 = sbr.rel (%p924) target = $region59
        $region58: #{tpu_custom_call.1} parent=46 // pred_region
          %s927 = smul.u32 16, %s20
          %s929 = ssub.s32 2048, 2048
          %930 = vsyncadd %s920, %s929
          %s931 = smul.addr %s927, 2
          %s932 = sadd.s32 %s21, %s931
          %s933 = smul.addr %s932, 128
          %s934 = scalar_lea.hbm %s2, %s933
          %s935 = sshll.u32 %s923, 4
          %s936 = int_to_ptr.vmem [resolvable:$true] %s935
          %941 = dma.vmem_to_hbm [thread:$0]  %s936, 2048, %s934, %s920, 128, 256, 8
        $region59: #{tpu_custom_call.1} parent=46 // pred_fallthru
          _
      $region47: #{tpu_custom_call.1} parent=5 // pred_fallthru
        _
      %p942 = scmp.le.s32.totalorder 2, %s11
      // Predicated region
      $region60: #{tpu_custom_call.1} parent=5 // pred_check
        %p943 = pneg %p942
      $region61: #{tpu_custom_call.1} parent=5 // pred_check_branch
        %945 = sbr.rel (%p943) target = $region63
      $region62: #{tpu_custom_call.1} parent=5 // pred_region
        %s946 = ssub.s32 %s11, 2
        // Predicated region
        $region64: #{tpu_custom_call.1} parent=62 // pred_check
          %p947 = pneg %p106
        $region65: #{tpu_custom_call.1} parent=62 // pred_check_branch
          %949 = sbr.rel (%p947) target = $region67
        $region66: #{tpu_custom_call.1} parent=62 // pred_region
          %s950 = sand.u32 %s91, 1
          %s951 = scalar_lea.sflag [#allocation5], %s950
          %s952 = sand.u32 %s91, 1
          %s953 = smul.addr %s952, 128
          %s954 = scalar_lea.vmem [#allocation4], %s953
          %955 = dma.done %s951, 2048
        $region67: #{tpu_custom_call.1} parent=62 // pred_fallthru
          _
      $region63: #{tpu_custom_call.1} parent=5 // pred_fallthru
        _
    $region6: #{tpu_custom_call.1} parent=1 // loop_footer
      %s15 = sadd.s32 1, %s11
    $region7: #{tpu_custom_call.1} parent=1 // loop_footer_branch
      %10 = sbr.rel target = $region3
    $region8: #{tpu_custom_call.1} parent=1 // loop_exit
      _
    %956 = vsyncpa [#allocation5], 1
    %s957 = scalar_lea.sflag [#allocation5], 1
    %958 = vsyncpa %s957, 1

</llo_original>
